<compile_context>
chip_gen: v6e
topology: v6e:2x2x1
jax: 0.10.0
libtpu: 0.0.40
codegen_flags: <defaults>
</compile_context>

<pallas_src>
import jax
import jax.numpy as jnp
from jax.experimental import pallas as pl
from jax.experimental.pallas import tpu as pltpu


# Rows per grid step. Per-row VMEM cost is tiny (x: 64 B bf16, fused out: 64 B,
# f32 intermediates ~200 B), so 8192 rows keeps the double-buffered working set
# well under the scoped-VMEM default on v5e (16 MiB) / v6e / v7x (32 MiB) while
# amortizing the ~0.35 us per-grid-step overhead.
_MAX_TILE_N = 8192


def _round_up(v, m):
    return (v + m - 1) // m * m


def _emb_classifier_kernel(x_ref,
                           w1_ref, b1_ref,
                           w2_ref, b2_ref,
                           w3_ref, b3_ref,
                           w4_ref, b4_ref,
                           out_ref):
    # x streams HBM->VMEM as bf16; upcast once and do all math in f32
    # (keeps v5e's f32-only VPU/EUP happy, accumulation is f32 everywhere).
    x = x_ref[...].astype(jnp.float32)

    # Layer 1: Linear + ReLU
    h = jnp.dot(x, w1_ref[...], preferred_element_type=jnp.float32) + b1_ref[...]
    h = jnp.maximum(h, 0.0)

    # Layer 2: Linear + ReLU
    h = jnp.dot(h, w2_ref[...], preferred_element_type=jnp.float32) + b2_ref[...]
    h = jnp.maximum(h, 0.0)

    # Layer 3: Linear + ReLU
    h = jnp.dot(h, w3_ref[...], preferred_element_type=jnp.float32) + b3_ref[...]
    h = jnp.maximum(h, 0.0)

    # Output layer: Linear
    y_lin = jnp.dot(h, w4_ref[...], preferred_element_type=jnp.float32) + b4_ref[...]

    # Softmax over dim=1 (the lane axis).
    m = jnp.max(y_lin, axis=1, keepdims=True)
    e = jnp.exp(y_lin - m)
    denom = jnp.sum(e, axis=1, keepdims=True)
    y = e * pl.reciprocal(denom, approx=True)

    # Single fused store: [ softmax | logits ] -> one output DMA per tile
    # instead of two lane-sparse ones.
    out_ref[...] = jnp.concatenate([y, y_lin], axis=1).astype(out_ref.dtype)


def emb_classifier_forward(x, params, *, max_tile_n=_MAX_TILE_N):
    """x: [N, x_dim] float32. params: W1..W4 [in,out], b1..b4 [1,out] float32."""
    n, x_dim = x.shape
    h_dim = params["W1"].shape[1]
    y_dim = params["W4"].shape[1]

    # Tile the batch axis; pad N so it divides evenly (multiple of 16 for clean
    # bf16 sublane packing). Padded rows are computed and sliced off.
    tile_n = min(max_tile_n, _round_up(max(n, 1), 16))
    n_pad = _round_up(max(n, 1), tile_n)

    x_in = x.astype(jnp.bfloat16)  # halve the HBM stream of the dominant input
    if n_pad != n:
        x_in = jnp.pad(x_in, ((0, n_pad - n), (0, 0)))

    grid = (n_pad // tile_n,)

    def resident(shape):
        # Full-array block, same block index every grid step -> stays in VMEM.
        return pl.BlockSpec(shape, lambda i: (0, 0))

    flops_per_row = 2 * (x_dim * h_dim + 2 * h_dim * h_dim + h_dim * y_dim)
    bytes_per_row = x_dim * 2 + 2 * y_dim * 4  # bf16 x in, fused f32 out
    param_bytes = sum(int(p.size) * 4 for p in params.values())
    cost = pl.CostEstimate(
        flops=int(flops_per_row * n_pad),
        transcendentals=int((y_dim + 1) * n_pad),
        bytes_accessed=int(bytes_per_row * n_pad + param_bytes),
    )

    fused = pl.pallas_call(
        _emb_classifier_kernel,
        out_shape=jax.ShapeDtypeStruct((n_pad, 2 * y_dim), jnp.float32),
        grid=grid,
        in_specs=[
            pl.BlockSpec((tile_n, x_dim), lambda i: (i, 0)),
            resident(params["W1"].shape), resident(params["b1"].shape),
            resident(params["W2"].shape), resident(params["b2"].shape),
            resident(params["W3"].shape), resident(params["b3"].shape),
            resident(params["W4"].shape), resident(params["b4"].shape),
        ],
        out_specs=pl.BlockSpec((tile_n, 2 * y_dim), lambda i: (i, 0)),
        compiler_params=pltpu.CompilerParams(
            dimension_semantics=("parallel",),
        ),
        cost_estimate=cost,
    )(
        x_in,
        params["W1"], params["b1"],
        params["W2"], params["b2"],
        params["W3"], params["b3"],
        params["W4"], params["b4"],
    )

    fused = fused[:n]
    y = fused[:, :y_dim]
    y_linear = fused[:, y_dim:]
    return y, y_linear


def init_params(key, x_dim, y_dim, hidden_size):
    """Deterministic synthetic init mirroring the nn.Sequential layer shapes."""
    h2 = hidden_size // 2
    dims = [(x_dim, h2), (h2, h2), (h2, h2), (h2, y_dim)]
    params = {}
    for i, (din, dout) in enumerate(dims, start=1):
        key, kw, kb = jax.random.split(key, 3)
        scale = 1.0 / jnp.sqrt(jnp.float32(din))
        params[f"W{i}"] = jax.random.uniform(
            kw, (din, dout), jnp.float32, minval=-scale, maxval=scale)
        params[f"b{i}"] = jax.random.uniform(
            kb, (1, dout), jnp.float32, minval=-scale, maxval=scale)
    return params


if __name__ == "__main__":
    # Small shapes consistent with the module: samples [N, x_dim].
    N, X_DIM, Y_DIM, HIDDEN = 8, 32, 8, 32

    key = jax.random.PRNGKey(0)
    key, kx = jax.random.split(key)
    x = jax.random.normal(kx, (N, X_DIM), jnp.float32)
    params = init_params(key, X_DIM, Y_DIM, HIDDEN)

    y, y_linear = emb_classifier_forward(x, params)
    jax.block_until_ready((y, y_linear))

    # Pure-JAX reference matching the kernel's numerics (x rounded to bf16,
    # math in f32). Tolerances account for bf16 rounding of the input stream
    # and the approx EUP reciprocal in the softmax.
    def ref(x, p):
        xr = x.astype(jnp.bfloat16).astype(jnp.float32)
        h = jnp.maximum(xr @ p["W1"] + p["b1"], 0.0)
        h = jnp.maximum(h @ p["W2"] + p["b2"], 0.0)
        h = jnp.maximum(h @ p["W3"] + p["b3"], 0.0)
        yl = h @ p["W4"] + p["b4"]
        return jax.nn.softmax(yl, axis=1), yl

    y_ref, yl_ref = ref(x, params)
    assert y.shape == (N, Y_DIM) and y_linear.shape == (N, Y_DIM)
    assert jnp.allclose(y_linear, yl_ref, atol=2e-2, rtol=2e-2), "logits mismatch"
    assert jnp.allclose(y, y_ref, atol=1e-2), "softmax output mismatch"

    print("KERNEL_OK")
</pallas_src>

<mosaic_0001>
module attributes {stable_mosaic.version = 11 : i64} {
  func.func @_emb_classifier_kernel(%arg0: i32, %arg1: memref<16x32xbf16, #tpu.memory_space<vmem>>, %arg2: memref<32x16xf32, #tpu.memory_space<vmem>>, %arg3: memref<1x16xf32, #tpu.memory_space<vmem>>, %arg4: memref<16x16xf32, #tpu.memory_space<vmem>>, %arg5: memref<1x16xf32, #tpu.memory_space<vmem>>, %arg6: memref<16x16xf32, #tpu.memory_space<vmem>>, %arg7: memref<1x16xf32, #tpu.memory_space<vmem>>, %arg8: memref<16x8xf32, #tpu.memory_space<vmem>>, %arg9: memref<1x8xf32, #tpu.memory_space<vmem>>, %arg10: memref<16x16xf32, #tpu.memory_space<vmem>>) attributes {dimension_semantics = [#tpu.dimension_semantics<parallel>], iteration_bounds = array<i64: 1>, scalar_prefetch = 0 : i64, scratch_operands = 0 : i64, tpu.core_type = #tpu.core_type<tc>, window_params = [{transform_indices = @transform_0, window_bounds = array<i64: 16, 32>}, {pipeline_mode = #tpu.pipeline_mode<synchronous>, transform_indices = @transform_1, window_bounds = array<i64: 32, 16>}, {pipeline_mode = #tpu.pipeline_mode<synchronous>, transform_indices = @transform_2, window_bounds = array<i64: 1, 16>}, {pipeline_mode = #tpu.pipeline_mode<synchronous>, transform_indices = @transform_3, window_bounds = array<i64: 16, 16>}, {pipeline_mode = #tpu.pipeline_mode<synchronous>, transform_indices = @transform_4, window_bounds = array<i64: 1, 16>}, {pipeline_mode = #tpu.pipeline_mode<synchronous>, transform_indices = @transform_5, window_bounds = array<i64: 16, 16>}, {pipeline_mode = #tpu.pipeline_mode<synchronous>, transform_indices = @transform_6, window_bounds = array<i64: 1, 16>}, {pipeline_mode = #tpu.pipeline_mode<synchronous>, transform_indices = @transform_7, window_bounds = array<i64: 16, 8>}, {pipeline_mode = #tpu.pipeline_mode<synchronous>, transform_indices = @transform_8, window_bounds = array<i64: 1, 8>}, {transform_indices = @transform_9, window_bounds = array<i64: 16, 16>}]} {
    %c0 = arith.constant 0 : index
    %c0_0 = arith.constant 0 : index
    %0 = vector.load %arg1[%c0, %c0_0] : memref<16x32xbf16, #tpu.memory_space<vmem>>, vector<16x32xbf16>
    %1 = arith.extf %0 : vector<16x32xbf16> to vector<16x32xf32>
    %c0_1 = arith.constant 0 : index
    %c0_2 = arith.constant 0 : index
    %2 = vector.load %arg2[%c0_1, %c0_2] : memref<32x16xf32, #tpu.memory_space<vmem>>, vector<32x16xf32>
    %cst = arith.constant dense<0.000000e+00> : vector<16x16xf32>
    %3 = tpu.matmul %1, %2, %cst {dimension_numbers = #tpu.dot_dimension_numbers<[1], [0], [0], [1], [0, 0, 1, 1], [], []>} : vector<16x32xf32>, vector<32x16xf32>, vector<16x16xf32> -> vector<16x16xf32>
    %c0_3 = arith.constant 0 : index
    %c0_4 = arith.constant 0 : index
    %4 = vector.load %arg3[%c0_3, %c0_4] : memref<1x16xf32, #tpu.memory_space<vmem>>, vector<1x16xf32>
    %5 = vector.broadcast %4 : vector<1x16xf32> to vector<16x16xf32>
    %6 = arith.addf %3, %5 : vector<16x16xf32>
    %cst_5 = arith.constant 0.000000e+00 : f32
    %7 = vector.broadcast %cst_5 : f32 to vector<16x16xf32>
    %8 = arith.maximumf %6, %7 : vector<16x16xf32>
    %c0_6 = arith.constant 0 : index
    %c0_7 = arith.constant 0 : index
    %9 = vector.load %arg4[%c0_6, %c0_7] : memref<16x16xf32, #tpu.memory_space<vmem>>, vector<16x16xf32>
    %cst_8 = arith.constant dense<0.000000e+00> : vector<16x16xf32>
    %10 = tpu.matmul %8, %9, %cst_8 {dimension_numbers = #tpu.dot_dimension_numbers<[1], [0], [0], [1], [0, 0, 1, 1], [], []>} : vector<16x16xf32>, vector<16x16xf32>, vector<16x16xf32> -> vector<16x16xf32>
    %c0_9 = arith.constant 0 : index
    %c0_10 = arith.constant 0 : index
    %11 = vector.load %arg5[%c0_9, %c0_10] : memref<1x16xf32, #tpu.memory_space<vmem>>, vector<1x16xf32>
    %12 = vector.broadcast %11 : vector<1x16xf32> to vector<16x16xf32>
    %13 = arith.addf %10, %12 : vector<16x16xf32>
    %cst_11 = arith.constant 0.000000e+00 : f32
    %14 = vector.broadcast %cst_11 : f32 to vector<16x16xf32>
    %15 = arith.maximumf %13, %14 : vector<16x16xf32>
    %c0_12 = arith.constant 0 : index
    %c0_13 = arith.constant 0 : index
    %16 = vector.load %arg6[%c0_12, %c0_13] : memref<16x16xf32, #tpu.memory_space<vmem>>, vector<16x16xf32>
    %cst_14 = arith.constant dense<0.000000e+00> : vector<16x16xf32>
    %17 = tpu.matmul %15, %16, %cst_14 {dimension_numbers = #tpu.dot_dimension_numbers<[1], [0], [0], [1], [0, 0, 1, 1], [], []>} : vector<16x16xf32>, vector<16x16xf32>, vector<16x16xf32> -> vector<16x16xf32>
    %c0_15 = arith.constant 0 : index
    %c0_16 = arith.constant 0 : index
    %18 = vector.load %arg7[%c0_15, %c0_16] : memref<1x16xf32, #tpu.memory_space<vmem>>, vector<1x16xf32>
    %19 = vector.broadcast %18 : vector<1x16xf32> to vector<16x16xf32>
    %20 = arith.addf %17, %19 : vector<16x16xf32>
    %cst_17 = arith.constant 0.000000e+00 : f32
    %21 = vector.broadcast %cst_17 : f32 to vector<16x16xf32>
    %22 = arith.maximumf %20, %21 : vector<16x16xf32>
    %c0_18 = arith.constant 0 : index
    %c0_19 = arith.constant 0 : index
    %23 = vector.load %arg8[%c0_18, %c0_19] : memref<16x8xf32, #tpu.memory_space<vmem>>, vector<16x8xf32>
    %cst_20 = arith.constant dense<0.000000e+00> : vector<16x8xf32>
    %24 = tpu.matmul %22, %23, %cst_20 {dimension_numbers = #tpu.dot_dimension_numbers<[1], [0], [0], [1], [0, 0, 1, 1], [], []>} : vector<16x16xf32>, vector<16x8xf32>, vector<16x8xf32> -> vector<16x8xf32>
    %c0_21 = arith.constant 0 : index
    %c0_22 = arith.constant 0 : index
    %25 = vector.load %arg9[%c0_21, %c0_22] : memref<1x8xf32, #tpu.memory_space<vmem>>, vector<1x8xf32>
    %26 = vector.broadcast %25 : vector<1x8xf32> to vector<16x8xf32>
    %27 = arith.addf %24, %26 : vector<16x8xf32>
    %cst_23 = arith.constant dense<0xFF800000> : vector<16xf32>
    %28 = vector.multi_reduction <maximumf>, %27, %cst_23 [1] : vector<16x8xf32> to vector<16xf32>
    %29 = vector.shape_cast %28 : vector<16xf32> to vector<16x1xf32>
    %30 = vector.broadcast %29 : vector<16x1xf32> to vector<16x8xf32>
    %31 = arith.subf %27, %30 : vector<16x8xf32>
    %32 = math.exp %31 : vector<16x8xf32>
    %cst_24 = arith.constant dense<0.000000e+00> : vector<16xf32>
    %33 = vector.multi_reduction <add>, %32, %cst_24 [1] : vector<16x8xf32> to vector<16xf32>
    %34 = vector.shape_cast %33 : vector<16xf32> to vector<16x1xf32>
    %35 = tpu.reciprocal %34 {approx = true} : vector<16x1xf32> -> vector<16x1xf32>
    %36 = vector.broadcast %35 : vector<16x1xf32> to vector<16x8xf32>
    %37 = arith.mulf %32, %36 : vector<16x8xf32>
    %38 = tpu.concatenate %37, %27 in 1 : vector<16x8xf32>, vector<16x8xf32> -> vector<16x16xf32>
    %c0_25 = arith.constant 0 : index
    %c0_26 = arith.constant 0 : index
    %39 = vector.load %arg10[%c0_25, %c0_26] : memref<16x16xf32, #tpu.memory_space<vmem>>, vector<16x16xf32>
    tpu.vector_store %arg10[%c0_25, %c0_26], %38 {strides = array<i32>} : memref<16x16xf32, #tpu.memory_space<vmem>>, vector<16x16xf32>,
    return
  }
  func.func @transform_0(%arg0: i32) -> (i32, i32) {
    %c0_i32 = arith.constant 0 : i32
    %c0_i32_0 = arith.constant 0 : i32
    return %arg0, %c0_i32 : i32, i32
  }
  func.func @transform_1(%arg0: i32) -> (i32, i32) {
    %c0_i32 = arith.constant 0 : i32
    %c0_i32_0 = arith.constant 0 : i32
    %c0_i32_1 = arith.constant 0 : i32
    return %c0_i32, %c0_i32_0 : i32, i32
  }
  func.func @transform_2(%arg0: i32) -> (i32, i32) {
    %c0_i32 = arith.constant 0 : i32
    %c0_i32_0 = arith.constant 0 : i32
    %c0_i32_1 = arith.constant 0 : i32
    return %c0_i32, %c0_i32_0 : i32, i32
  }
  func.func @transform_3(%arg0: i32) -> (i32, i32) {
    %c0_i32 = arith.constant 0 : i32
    %c0_i32_0 = arith.constant 0 : i32
    %c0_i32_1 = arith.constant 0 : i32
    return %c0_i32, %c0_i32_0 : i32, i32
  }
  func.func @transform_4(%arg0: i32) -> (i32, i32) {
    %c0_i32 = arith.constant 0 : i32
    %c0_i32_0 = arith.constant 0 : i32
    %c0_i32_1 = arith.constant 0 : i32
    return %c0_i32, %c0_i32_0 : i32, i32
  }
  func.func @transform_5(%arg0: i32) -> (i32, i32) {
    %c0_i32 = arith.constant 0 : i32
    %c0_i32_0 = arith.constant 0 : i32
    %c0_i32_1 = arith.constant 0 : i32
    return %c0_i32, %c0_i32_0 : i32, i32
  }
  func.func @transform_6(%arg0: i32) -> (i32, i32) {
    %c0_i32 = arith.constant 0 : i32
    %c0_i32_0 = arith.constant 0 : i32
    %c0_i32_1 = arith.constant 0 : i32
    return %c0_i32, %c0_i32_0 : i32, i32
  }
  func.func @transform_7(%arg0: i32) -> (i32, i32) {
    %c0_i32 = arith.constant 0 : i32
    %c0_i32_0 = arith.constant 0 : i32
    %c0_i32_1 = arith.constant 0 : i32
    return %c0_i32, %c0_i32_0 : i32, i32
  }
  func.func @transform_8(%arg0: i32) -> (i32, i32) {
    %c0_i32 = arith.constant 0 : i32
    %c0_i32_0 = arith.constant 0 : i32
    %c0_i32_1 = arith.constant 0 : i32
    return %c0_i32, %c0_i32_0 : i32, i32
  }
  func.func @transform_9(%arg0: i32) -> (i32, i32) {
    %c0_i32 = arith.constant 0 : i32
    %c0_i32_0 = arith.constant 0 : i32
    return %arg0, %c0_i32 : i32, i32
  }
}

</mosaic_0001>

<llo_original>
// kernel: tpu_custom_call.1
$region0: #{tpu_custom_call.1}
  #allocation0 [shape = 'u32[]', space=smem, size = 0x4, offset = 0x4, fixed_abs, tag = 'smem constant byte address 0x4 - core index']
  #allocation1 [shape = 'u32[144,128]{1,0:T(1,128)}', space=vmem, size = 0x12000, scoped, tag = 'internal scratch']
  %s0 = inlined_call_operand.vmem [shape: bf16[16,32], index: 0, kind: input, shape index: {}]
  %s1 = inlined_call_operand.vmem [shape: f32[32,16], index: 1, kind: input, shape index: {}]
  %s2 = inlined_call_operand.vmem [shape: f32[1,16], index: 2, kind: input, shape index: {}]
  %s3 = inlined_call_operand.vmem [shape: f32[16,16], index: 3, kind: input, shape index: {}]
  %s4 = inlined_call_operand.vmem [shape: f32[1,16], index: 4, kind: input, shape index: {}]
  %s5 = inlined_call_operand.vmem [shape: f32[16,16], index: 5, kind: input, shape index: {}]
  %s6 = inlined_call_operand.vmem [shape: f32[1,16], index: 6, kind: input, shape index: {}]
  %s7 = inlined_call_operand.vmem [shape: f32[16,8], index: 7, kind: input, shape index: {}]
  %s8 = inlined_call_operand.vmem [shape: f32[1,8], index: 8, kind: input, shape index: {}]
  %s9 = inlined_call_operand.hbm [shape: f32[16,16], index: 9, kind: output, shape index: {}]
  %s10 = sld [smem:[#allocation0]]
  $region46: #{tpu_custom_call.1} parent=0
    _
  %s12 = ssub.s32 1, %s10
  %s13 = scalar_select 0, %s12, %s10
  $region1: #{tpu_custom_call.1} parent=0
    #allocation2 [shape = 'u8[8192]{0}', space=vmem, size = 0x2000, scoped, tag = 'output window, operand 0, single buffered']
    #allocation3 [shape = 's32[1]{0}', space=sflag, size = 0x4, scoped, tag = 'scoped memory for tpu_custom_call.1']
    %14 = vsyncpa [#allocation3], 0
    // Predicated region
    $region2: #{tpu_custom_call.1} parent=1 // pred_check
      _
    $region3: #{tpu_custom_call.1} parent=1 // pred_check_branch
      %16 = sbr.rel (0) target = $region5
    $region4: #{tpu_custom_call.1} parent=1 // pred_region
      _
    $region5: #{tpu_custom_call.1} parent=1 // pred_fallthru
      _
    // Predicated region
    $region6: #{tpu_custom_call.1} parent=1 // pred_check
      _
    $region7: #{tpu_custom_call.1} parent=1 // pred_check_branch
      %18 = sbr.rel (0) target = $region9
    $region8: #{tpu_custom_call.1} parent=1 // pred_region
      _
    $region9: #{tpu_custom_call.1} parent=1 // pred_fallthru
      _
    // Predicated region
    $region10: #{tpu_custom_call.1} parent=1 // pred_check
      _
    $region11: #{tpu_custom_call.1} parent=1 // pred_check_branch
      %20 = sbr.rel (0) target = $region13
    $region12: #{tpu_custom_call.1} parent=1 // pred_region
      _
    $region13: #{tpu_custom_call.1} parent=1 // pred_fallthru
      _
    // Predicated region
    $region14: #{tpu_custom_call.1} parent=1 // pred_check
      _
    $region15: #{tpu_custom_call.1} parent=1 // pred_check_branch
      %22 = sbr.rel (0) target = $region17
    $region16: #{tpu_custom_call.1} parent=1 // pred_region
      _
    $region17: #{tpu_custom_call.1} parent=1 // pred_fallthru
      _
    // Predicated region
    $region18: #{tpu_custom_call.1} parent=1 // pred_check
      _
    $region19: #{tpu_custom_call.1} parent=1 // pred_check_branch
      %24 = sbr.rel (0) target = $region21
    $region20: #{tpu_custom_call.1} parent=1 // pred_region
      _
    $region21: #{tpu_custom_call.1} parent=1 // pred_fallthru
      _
    // Predicated region
    $region22: #{tpu_custom_call.1} parent=1 // pred_check
      _
    $region23: #{tpu_custom_call.1} parent=1 // pred_check_branch
      %26 = sbr.rel (0) target = $region25
    $region24: #{tpu_custom_call.1} parent=1 // pred_region
      _
    $region25: #{tpu_custom_call.1} parent=1 // pred_fallthru
      _
    // Predicated region
    $region26: #{tpu_custom_call.1} parent=1 // pred_check
      _
    $region27: #{tpu_custom_call.1} parent=1 // pred_check_branch
      %28 = sbr.rel (0) target = $region29
    $region28: #{tpu_custom_call.1} parent=1 // pred_region
      _
    $region29: #{tpu_custom_call.1} parent=1 // pred_fallthru
      _
    // Predicated region
    $region30: #{tpu_custom_call.1} parent=1 // pred_check
      _
    $region31: #{tpu_custom_call.1} parent=1 // pred_check_branch
      %30 = sbr.rel (0) target = $region33
    $region32: #{tpu_custom_call.1} parent=1 // pred_region
      _
    $region33: #{tpu_custom_call.1} parent=1 // pred_fallthru
      _
    // Predicated region
    $region34: #{tpu_custom_call.1} parent=1 // pred_check
      _
    $region35: #{tpu_custom_call.1} parent=1 // pred_check_branch
      %32 = sbr.rel (0) target = $region37
    $region36: #{tpu_custom_call.1} parent=1 // pred_region
      _
    $region37: #{tpu_custom_call.1} parent=1 // pred_fallthru
      _
    %v33 = vld [vmem:[%s0] sm:$0xf]
    %v34 = vld [vmem:[%s0 + $0x4] sm:$0xf]
    %v35 = vunpack.c.l.bf16 %v33
    %v36 = vunpack.c.l.bf16 %v34
    %v37 = vld [vmem:[%s1] sm:$0xff]
    %v38 = vld [vmem:[%s1 + $0x8] sm:$0xff]
    %v39 = vld [vmem:[%s1 + $0x10] sm:$0xff]
    %v40 = vld [vmem:[%s1 + $0x18] sm:$0xff]
    %v41 = vld [vmem:[%s2] sm:$0x1]
    %v43 = vlaneseq
    %v44 = vshrl.u32 %v43, 7
    %v45 = vsub.s32 0, %v44
    %v46 = vrot.slane %v41, %v45
    %vm48 = vcmask 261120
    %v50 = vsel %vm48, %v35, 0
    %v53 = vsel %vm48, %v36, 0
    %55 = vmatprep.subr.mxu0 0.0
    %56 = vmatpush1.msra.mxu0 0.0
    %57 = vmatprep.subr.mxu0 0.0
    %58 = vmatpush1.msra.mxu0 0.0
    %59 = vmatprep.subr.mxu0 0.0
    %60 = vmatpush1.msra.mxu0 0.0
    %61 = vmatprep.subr.mxu0 0.0
    %62 = vmatpush1.msra.mxu0 0.0
    %63 = vmatprep.subr.mxu0 0.0
    %64 = vmatpush1.msra.mxu0 0.0
    %65 = vmatprep.subr.mxu0 0.0
    %66 = vmatpush1.msra.mxu0 0.0
    %67 = vmatprep.subr.mxu0 0.0
    %68 = vmatpush1.msra.mxu0 0.0
    %69 = vmatprep.subr.mxu0 0.0
    %70 = vmatpush1.msra.mxu0 0.0
    %71 = vmatprep.subr.mxu0 0.0
    %72 = vmatpush1.msra.mxu0 0.0
    %73 = vmatprep.subr.mxu0 0.0
    %74 = vmatpush1.msra.mxu0 0.0
    %75 = vmatprep.subr.mxu0 0.0
    %76 = vmatpush1.msra.mxu0 0.0
    %77 = vmatprep.subr.mxu0 0.0
    %78 = vmatpush1.msra.mxu0 0.0
    %79 = vmatprep.subr.mxu0 0.0
    %80 = vmatpush1.msra.mxu0 %v40
    %81 = vmatprep.subr.mxu0 0.0
    %82 = vmatpush1.msra.mxu0 %v39
    %83 = vmatprep.subr.mxu0 0.0
    %84 = vmatpush1.msra.mxu0 %v38
    %85 = vmatprep.subr.mxu0 0.0
    %86 = vmatpush1.msra.mxu0 %v37
    %87 = vmatprep.subr.mxu0 0.0
    %88 = vmatpush2.msra.mxu0 0.0
    %89 = vmatprep.subr.mxu0 0.0
    %90 = vmatpush2.msra.mxu0 0.0
    %91 = vmatprep.subr.mxu0 0.0
    %92 = vmatpush2.msra.mxu0 0.0
    %93 = vmatprep.subr.mxu0 0.0
    %94 = vmatpush2.msra.mxu0 0.0
    %95 = vmatprep.subr.mxu0 0.0
    %96 = vmatpush2.msra.mxu0 0.0
    %97 = vmatprep.subr.mxu0 0.0
    %98 = vmatpush2.msra.mxu0 0.0
    %99 = vmatprep.subr.mxu0 0.0
    %100 = vmatpush2.msra.mxu0 0.0
    %101 = vmatprep.subr.mxu0 0.0
    %102 = vmatpush2.msra.mxu0 0.0
    %103 = vmatprep.subr.mxu0 0.0
    %104 = vmatpush2.msra.mxu0 0.0
    %105 = vmatprep.subr.mxu0 0.0
    %106 = vmatpush2.msra.mxu0 0.0
    %107 = vmatprep.subr.mxu0 0.0
    %108 = vmatpush2.msra.mxu0 0.0
    %109 = vmatprep.subr.mxu0 0.0
    %110 = vmatpush2.msra.mxu0 0.0
    %111 = vmatprep.subr.mxu0 0.0
    %112 = vmatpush2.msra.mxu0 0.0
    %113 = vmatprep.subr.mxu0 0.0
    %114 = vmatpush2.msra.mxu0 0.0
    %115 = vmatprep.subr.mxu0 0.0
    %116 = vmatpush2.msra.mxu0 0.0
    %117 = vmatprep.subr.mxu0 0.0
    %118 = vmatpush2.msra.mxu0 0.0
    %119 = vmatprep.mubr.f32.mxu0 0.0
    %120 = vmatmul.mubr.f32.gmra.mxu0 %v50
    %v121 = vpop.f32.mrf.mxu0
    %v122 = vadd.f32 %v46, %v121
    %v123 = vpop.f32.mrf.mxu0
    %124 = vmatprep.mubr.f32.mxu0 0.0
    %125 = vmatmul.mubr.f32.gmra.mxu0 %v53
    %v126 = vpop.f32.mrf.mxu0
    %v127 = vadd.f32 %v46, %v126
    %v128 = vpop.f32.mrf.mxu0
    %129 = vdwg.mxu0
    %v130 = vmax.f32 %v122, 0.0
    %v131 = vmax.f32 %v127, 0.0
    %v132 = vld [vmem:[%s3] sm:$0xff]
    %v133 = vld [vmem:[%s3 + $0x8] sm:$0xff]
    %v134 = vld [vmem:[%s4] sm:$0x1]
    %v136 = vlaneseq
    %v137 = vshrl.u32 %v136, 7
    %v138 = vsub.s32 0, %v137
    %v139 = vrot.slane %v134, %v138
    %vm141 = vcmask 130048
    %v143 = vsel %vm141, %v130, 0
    %v146 = vsel %vm141, %v131, 0
    %148 = vmatprep.subr.mxu0 0.0
    %149 = vmatpush1.msra.mxu0 0.0
    %150 = vmatprep.subr.mxu0 0.0
    %151 = vmatpush1.msra.mxu0 0.0
    %152 = vmatprep.subr.mxu0 0.0
    %153 = vmatpush1.msra.mxu0 0.0
    %154 = vmatprep.subr.mxu0 0.0
    %155 = vmatpush1.msra.mxu0 0.0
    %156 = vmatprep.subr.mxu0 0.0
    %157 = vmatpush1.msra.mxu0 0.0
    %158 = vmatprep.subr.mxu0 0.0
    %159 = vmatpush1.msra.mxu0 0.0
    %160 = vmatprep.subr.mxu0 0.0
    %161 = vmatpush1.msra.mxu0 0.0
    %162 = vmatprep.subr.mxu0 0.0
    %163 = vmatpush1.msra.mxu0 0.0
    %164 = vmatprep.subr.mxu0 0.0
    %165 = vmatpush1.msra.mxu0 0.0
    %166 = vmatprep.subr.mxu0 0.0
    %167 = vmatpush1.msra.mxu0 0.0
    %168 = vmatprep.subr.mxu0 0.0
    %169 = vmatpush1.msra.mxu0 0.0
    %170 = vmatprep.subr.mxu0 0.0
    %171 = vmatpush1.msra.mxu0 0.0
    %172 = vmatprep.subr.mxu0 0.0
    %173 = vmatpush1.msra.mxu0 0.0
    %174 = vmatprep.subr.mxu0 0.0
    %175 = vmatpush1.msra.mxu0 0.0
    %176 = vmatprep.subr.mxu0 0.0
    %177 = vmatpush1.msra.mxu0 %v133
    %178 = vmatprep.subr.mxu0 0.0
    %179 = vmatpush1.msra.mxu0 %v132
    %180 = vmatprep.subr.mxu0 0.0
    %181 = vmatpush2.msra.mxu0 0.0
    %182 = vmatprep.subr.mxu0 0.0
    %183 = vmatpush2.msra.mxu0 0.0
    %184 = vmatprep.subr.mxu0 0.0
    %185 = vmatpush2.msra.mxu0 0.0
    %186 = vmatprep.subr.mxu0 0.0
    %187 = vmatpush2.msra.mxu0 0.0
    %188 = vmatprep.subr.mxu0 0.0
    %189 = vmatpush2.msra.mxu0 0.0
    %190 = vmatprep.subr.mxu0 0.0
    %191 = vmatpush2.msra.mxu0 0.0
    %192 = vmatprep.subr.mxu0 0.0
    %193 = vmatpush2.msra.mxu0 0.0
    %194 = vmatprep.subr.mxu0 0.0
    %195 = vmatpush2.msra.mxu0 0.0
    %196 = vmatprep.subr.mxu0 0.0
    %197 = vmatpush2.msra.mxu0 0.0
    %198 = vmatprep.subr.mxu0 0.0
    %199 = vmatpush2.msra.mxu0 0.0
    %200 = vmatprep.subr.mxu0 0.0
    %201 = vmatpush2.msra.mxu0 0.0
    %202 = vmatprep.subr.mxu0 0.0
    %203 = vmatpush2.msra.mxu0 0.0
    %204 = vmatprep.subr.mxu0 0.0
    %205 = vmatpush2.msra.mxu0 0.0
    %206 = vmatprep.subr.mxu0 0.0
    %207 = vmatpush2.msra.mxu0 0.0
    %208 = vmatprep.subr.mxu0 0.0
    %209 = vmatpush2.msra.mxu0 0.0
    %210 = vmatprep.subr.mxu0 0.0
    %211 = vmatpush2.msra.mxu0 0.0
    %212 = vmatprep.mubr.f32.mxu0 0.0
    %213 = vmatmul.mubr.f32.gmra.mxu0 %v143
    %v214 = vpop.f32.mrf.mxu0
    %v215 = vadd.f32 %v139, %v214
    %v216 = vpop.f32.mrf.mxu0
    %217 = vmatprep.mubr.f32.mxu0 0.0
    %218 = vmatmul.mubr.f32.gmra.mxu0 %v146
    %v219 = vpop.f32.mrf.mxu0
    %v220 = vadd.f32 %v139, %v219
    %v221 = vpop.f32.mrf.mxu0
    %222 = vdwg.mxu0
    %v223 = vmax.f32 %v215, 0.0
    %v224 = vmax.f32 %v220, 0.0
    %v225 = vld [vmem:[%s5] sm:$0xff]
    %v226 = vld [vmem:[%s5 + $0x8] sm:$0xff]
    %v227 = vld [vmem:[%s6] sm:$0x1]
    %v229 = vlaneseq
    %v230 = vshrl.u32 %v229, 7
    %v231 = vsub.s32 0, %v230
    %v232 = vrot.slane %v227, %v231
    %v235 = vsel %vm141, %v223, 0
    %v238 = vsel %vm141, %v224, 0
    %240 = vmatprep.subr.mxu0 0.0
    %241 = vmatpush1.msra.mxu0 0.0
    %242 = vmatprep.subr.mxu0 0.0
    %243 = vmatpush1.msra.mxu0 0.0
    %244 = vmatprep.subr.mxu0 0.0
    %245 = vmatpush1.msra.mxu0 0.0
    %246 = vmatprep.subr.mxu0 0.0
    %247 = vmatpush1.msra.mxu0 0.0
    %248 = vmatprep.subr.mxu0 0.0
    %249 = vmatpush1.msra.mxu0 0.0
    %250 = vmatprep.subr.mxu0 0.0
    %251 = vmatpush1.msra.mxu0 0.0
    %252 = vmatprep.subr.mxu0 0.0
    %253 = vmatpush1.msra.mxu0 0.0
    %254 = vmatprep.subr.mxu0 0.0
    %255 = vmatpush1.msra.mxu0 0.0
    %256 = vmatprep.subr.mxu0 0.0
    %257 = vmatpush1.msra.mxu0 0.0
    %258 = vmatprep.subr.mxu0 0.0
    %259 = vmatpush1.msra.mxu0 0.0
    %260 = vmatprep.subr.mxu0 0.0
    %261 = vmatpush1.msra.mxu0 0.0
    %262 = vmatprep.subr.mxu0 0.0
    %263 = vmatpush1.msra.mxu0 0.0
    %264 = vmatprep.subr.mxu0 0.0
    %265 = vmatpush1.msra.mxu0 0.0
    %266 = vmatprep.subr.mxu0 0.0
    %267 = vmatpush1.msra.mxu0 0.0
    %268 = vmatprep.subr.mxu0 0.0
    %269 = vmatpush1.msra.mxu0 %v226
    %270 = vmatprep.subr.mxu0 0.0
    %271 = vmatpush1.msra.mxu0 %v225
    %272 = vmatprep.subr.mxu0 0.0
    %273 = vmatpush2.msra.mxu0 0.0
    %274 = vmatprep.subr.mxu0 0.0
    %275 = vmatpush2.msra.mxu0 0.0
    %276 = vmatprep.subr.mxu0 0.0
    %277 = vmatpush2.msra.mxu0 0.0
    %278 = vmatprep.subr.mxu0 0.0
    %279 = vmatpush2.msra.mxu0 0.0
    %280 = vmatprep.subr.mxu0 0.0
    %281 = vmatpush2.msra.mxu0 0.0
    %282 = vmatprep.subr.mxu0 0.0
    %283 = vmatpush2.msra.mxu0 0.0
    %284 = vmatprep.subr.mxu0 0.0
    %285 = vmatpush2.msra.mxu0 0.0
    %286 = vmatprep.subr.mxu0 0.0
    %287 = vmatpush2.msra.mxu0 0.0
    %288 = vmatprep.subr.mxu0 0.0
    %289 = vmatpush2.msra.mxu0 0.0
    %290 = vmatprep.subr.mxu0 0.0
    %291 = vmatpush2.msra.mxu0 0.0
    %292 = vmatprep.subr.mxu0 0.0
    %293 = vmatpush2.msra.mxu0 0.0
    %294 = vmatprep.subr.mxu0 0.0
    %295 = vmatpush2.msra.mxu0 0.0
    %296 = vmatprep.subr.mxu0 0.0
    %297 = vmatpush2.msra.mxu0 0.0
    %298 = vmatprep.subr.mxu0 0.0
    %299 = vmatpush2.msra.mxu0 0.0
    %300 = vmatprep.subr.mxu0 0.0
    %301 = vmatpush2.msra.mxu0 0.0
    %302 = vmatprep.subr.mxu0 0.0
    %303 = vmatpush2.msra.mxu0 0.0
    %304 = vmatprep.mubr.f32.mxu0 0.0
    %305 = vmatmul.mubr.f32.gmra.mxu0 %v235
    %v306 = vpop.f32.mrf.mxu0
    %v307 = vadd.f32 %v232, %v306
    %v308 = vpop.f32.mrf.mxu0
    %309 = vmatprep.mubr.f32.mxu0 0.0
    %310 = vmatmul.mubr.f32.gmra.mxu0 %v238
    %v311 = vpop.f32.mrf.mxu0
    %v312 = vadd.f32 %v232, %v311
    %v313 = vpop.f32.mrf.mxu0
    %314 = vdwg.mxu0
    %v315 = vmax.f32 %v307, 0.0
    %v316 = vmax.f32 %v312, 0.0
    %v317 = vld [vmem:[%s7] sm:$0xff]
    %v318 = vld [vmem:[%s7 + $0x8] sm:$0xff]
    %v319 = vld [vmem:[%s8] sm:$0x1]
    %v321 = vlaneseq
    %v322 = vshrl.u32 %v321, 7
    %v323 = vsub.s32 0, %v322
    %v324 = vrot.slane %v319, %v323
    %v327 = vsel %vm141, %v315, 0
    %v330 = vsel %vm141, %v316, 0
    %332 = vmatprep.subr.mxu0 0.0
    %333 = vmatpush1.msra.mxu0 0.0
    %334 = vmatprep.subr.mxu0 0.0
    %335 = vmatpush1.msra.mxu0 0.0
    %336 = vmatprep.subr.mxu0 0.0
    %337 = vmatpush1.msra.mxu0 0.0
    %338 = vmatprep.subr.mxu0 0.0
    %339 = vmatpush1.msra.mxu0 0.0
    %340 = vmatprep.subr.mxu0 0.0
    %341 = vmatpush1.msra.mxu0 0.0
    %342 = vmatprep.subr.mxu0 0.0
    %343 = vmatpush1.msra.mxu0 0.0
    %344 = vmatprep.subr.mxu0 0.0
    %345 = vmatpush1.msra.mxu0 0.0
    %346 = vmatprep.subr.mxu0 0.0
    %347 = vmatpush1.msra.mxu0 0.0
    %348 = vmatprep.subr.mxu0 0.0
    %349 = vmatpush1.msra.mxu0 0.0
    %350 = vmatprep.subr.mxu0 0.0
    %351 = vmatpush1.msra.mxu0 0.0
    %352 = vmatprep.subr.mxu0 0.0
    %353 = vmatpush1.msra.mxu0 0.0
    %354 = vmatprep.subr.mxu0 0.0
    %355 = vmatpush1.msra.mxu0 0.0
    %356 = vmatprep.subr.mxu0 0.0
    %357 = vmatpush1.msra.mxu0 0.0
    %358 = vmatprep.subr.mxu0 0.0
    %359 = vmatpush1.msra.mxu0 0.0
    %360 = vmatprep.subr.mxu0 0.0
    %361 = vmatpush1.msra.mxu0 %v318
    %362 = vmatprep.subr.mxu0 0.0
    %363 = vmatpush1.msra.mxu0 %v317
    %364 = vmatprep.subr.mxu0 0.0
    %365 = vmatpush2.msra.mxu0 0.0
    %366 = vmatprep.subr.mxu0 0.0
    %367 = vmatpush2.msra.mxu0 0.0
    %368 = vmatprep.subr.mxu0 0.0
    %369 = vmatpush2.msra.mxu0 0.0
    %370 = vmatprep.subr.mxu0 0.0
    %371 = vmatpush2.msra.mxu0 0.0
    %372 = vmatprep.subr.mxu0 0.0
    %373 = vmatpush2.msra.mxu0 0.0
    %374 = vmatprep.subr.mxu0 0.0
    %375 = vmatpush2.msra.mxu0 0.0
    %376 = vmatprep.subr.mxu0 0.0
    %377 = vmatpush2.msra.mxu0 0.0
    %378 = vmatprep.subr.mxu0 0.0
    %379 = vmatpush2.msra.mxu0 0.0
    %380 = vmatprep.subr.mxu0 0.0
    %381 = vmatpush2.msra.mxu0 0.0
    %382 = vmatprep.subr.mxu0 0.0
    %383 = vmatpush2.msra.mxu0 0.0
    %384 = vmatprep.subr.mxu0 0.0
    %385 = vmatpush2.msra.mxu0 0.0
    %386 = vmatprep.subr.mxu0 0.0
    %387 = vmatpush2.msra.mxu0 0.0
    %388 = vmatprep.subr.mxu0 0.0
    %389 = vmatpush2.msra.mxu0 0.0
    %390 = vmatprep.subr.mxu0 0.0
    %391 = vmatpush2.msra.mxu0 0.0
    %392 = vmatprep.subr.mxu0 0.0
    %393 = vmatpush2.msra.mxu0 0.0
    %394 = vmatprep.subr.mxu0 0.0
    %395 = vmatpush2.msra.mxu0 0.0
    %396 = vmatprep.mubr.f32.mxu0 0.0
    %397 = vmatmul.mubr.f32.gmra.mxu0 %v327
    %v398 = vpop.f32.mrf.mxu0
    %v399 = vadd.f32 %v324, %v398
    %v400 = vpop.f32.mrf.mxu0
    %401 = vmatprep.mubr.f32.mxu0 0.0
    %402 = vmatmul.mubr.f32.gmra.mxu0 %v330
    %v403 = vpop.f32.mrf.mxu0
    %v404 = vadd.f32 %v324, %v403
    %v405 = vpop.f32.mrf.mxu0
    %406 = vdwg.mxu0
    %vm407 = vcmask 64512
    %v408 = vsel %vm407, %v399, -inf
    %409 = vmax.xlane.f32.xlu0 %v408
    %v410 = vpop.xlane.xlu0 %409
    %v411 = vsel %vm407, %v404, -inf
    %412 = vmax.xlane.f32.xlu0 %v411
    %v413 = vpop.xlane.xlu0 %412
    %v414 = vsub.f32 %v399, %v410
    %v415 = vsub.f32 %v404, %v413
    %v416 = vmul.f32 %v414, 1.442695
    %v417 = vpow.pop %v416
    %v418 = vmul.f32 %v415, 1.442695
    %v419 = vpow.pop %v418
    %v420 = vsel %vm407, %v417, 0.0
    %421 = vadd.xlane.f32.xlu0 %v420
    %v422 = vpop.xlane.xlu0 %421
    %v423 = vsel %vm407, %v419, 0.0
    %424 = vadd.xlane.f32.xlu0 %v423
    %v425 = vpop.xlane.xlu0 %424
    %v426 = vrcp.pop %v422
    %v427 = vrcp.pop %v425
    %v428 = vmul.f32 %v417, %v426
    %v429 = vmul.f32 %v419, %v427
    %432 = vrot.lane.b32.xlu0 %v399, 8
    %v433 = vpop.permute.xlu0 %432
    %434 = vrot.lane.b32.xlu0 %v404, 8
    %v435 = vpop.permute.xlu0 %434
    %v438 = vsel %vm407, %v428, %v433
    %v439 = vsel %vm407, %v429, %v435
    %440 = vst.msk [vmem:[#allocation2] sm:$0xff] %vm141, %v438
    %441 = vst.msk [vmem:[#allocation2 + $0x8] sm:$0xff] %vm141, %v439
    // Predicated region
    $region38: #{tpu_custom_call.1} parent=1 // pred_check
      _
    $region39: #{tpu_custom_call.1} parent=1 // pred_check_branch
      %443 = sbr.rel (0) target = $region41
    $region40: #{tpu_custom_call.1} parent=1 // pred_region
      %s445 = ssub.s32 256, 256
      %446 = vsyncadd [#allocation3], %s445
      %s447 = sshll.u32 [#allocation2], 4
      %s448 = int_to_ptr.vmem [resolvable:$true] %s447
      %453 = dma.vmem_to_hbm [thread:$0]  %s448, 256, %s9, [#allocation3], 128, 128, 8
    $region41: #{tpu_custom_call.1} parent=1 // pred_fallthru
      _
    // Predicated region
    $region42: #{tpu_custom_call.1} parent=1 // pred_check
      _
    $region43: #{tpu_custom_call.1} parent=1 // pred_check_branch
      %455 = sbr.rel (0) target = $region45
    $region44: #{tpu_custom_call.1} parent=1 // pred_region
      %456 = dma.done [#allocation3], 256
    $region45: #{tpu_custom_call.1} parent=1 // pred_fallthru
      _
    %457 = vsyncpa [#allocation3], 1

</llo_original>
